<compile_context>
chip_gen: v6e
topology: v6e:2x2x1
jax: 0.10.0
libtpu: 0.0.40
codegen_flags: <defaults>
</compile_context>

<pallas_src>
import jax
import jax.numpy as jnp
from jax.experimental import pallas as pl
from jax.experimental.pallas import tpu as pltpu

# ---- toy shapes (stand-ins for 768 -> 1024 projection and a ~20k queue) ----
B = 8              # batch rows (per-device; gather == 0)
D_IN = 64          # student hidden size (stand-in for 768)
D_OUT = 128        # projection / teacher hidden size (stand-in for 1024)
Q = 250            # queue length; deliberately NOT a multiple of TQ (ragged tail)
QUEUE_LEN = 20000  # args.queue_len cap (> B + Q here, so new queue == full concat)
TEMP_EXP = 1       # args.temp_exp
MSE = 1            # mse flag in forward()
TEMP_INIT = 0.05   # args.temp
EPS = 1e-12        # zero-norm guard

# ---- streamed-reduction tiling ----
NCORES = 2         # leading "parallel" axis: 2 TCs on v7x; plain outer loop on v5e/v6e
TQ = 128           # key rows per tile; use 512-2048 at production scale (Q~20k, D_OUT=1024)
N_KEYS = B + Q                                     # rows of cat([key, queue])
_PAD_TO = NCORES * TQ
N_PAD = ((N_KEYS + _PAD_TO - 1) // _PAD_TO) * _PAD_TO
N_INNER = N_PAD // (NCORES * TQ)                   # inner (arbitrary) grid extent per core
NEG_BIG = -1.0e30                                  # finite "-inf" for padded-row masking


def cskd_lse_kernel(q_ref, keys_ref, lse_ref, m_scr, l_scr):
    c = pl.program_id(0)       # core / parallel shard of the key set
    i = pl.program_id(1)       # streamed key tile within this shard

    @pl.when(i == 0)
    def _init():
        m_scr[...] = jnp.full((B, 1), NEG_BIG, jnp.float32)
        l_scr[...] = jnp.zeros((B, 1), jnp.float32)

    # scores for this tile: (temp * q_norm) . key_rows; bf16 MXU inputs,
    # f32 accumulation, contraction on the last axis of both (no .T pass).
    s = jax.lax.dot_general(
        q_ref[...], keys_ref[...],
        dimension_numbers=(((1,), (1,)), ((), ())),
        preferred_element_type=jnp.float32)                    # (B, TQ)

    if N_PAD != N_KEYS:  # mask zero-padded key rows out of the softmax
        tile = c * N_INNER + i
        col = tile * TQ + jax.lax.broadcasted_iota(jnp.int32, (B, TQ), 1)
        s = jnp.where(col < N_KEYS, s, NEG_BIG)

    # online-softmax LSE update
    m_prev = m_scr[...]
    m_new = jnp.maximum(m_prev, jnp.max(s, axis=-1, keepdims=True))
    alpha = jnp.exp(m_prev - m_new)
    l_scr[...] = alpha * l_scr[...] + jnp.sum(jnp.exp(s - m_new),
                                              axis=-1, keepdims=True)
    m_scr[...] = m_new

    @pl.when(i == pl.num_programs(1) - 1)
    def _finalize():
        lse_ref[0] = m_scr[...] + jnp.log(l_scr[...])          # partial LSE for shard c


@jax.jit
def cskd_forward(logit_scale, student_feat, teacher_feat, queue, W, b):
    # --- tiny XLA preamble (hoisted out of the kernel so W/b/features do not
    #     eat double-buffered VMEM that the queue stream needs) ---
    sf = student_feat @ W + b                                  # nn.Linear
    tf = teacher_feat
    key = tf * jax.lax.rsqrt(jnp.sum(tf * tf, axis=-1, keepdims=True) + EPS)
    qn = sf * jax.lax.rsqrt(jnp.sum(sf * sf, axis=-1, keepdims=True) + EPS)
    temp = jnp.exp(logit_scale[0]) if TEMP_EXP == 1 else logit_scale[0]
    diag = temp * jnp.sum(qn * key, axis=-1)                   # positive logits (B,)
    q_scaled = (qn * temp).astype(jnp.bfloat16)                # bf16 MXU LHS

    # full key set cat([key, queue]); f32 copy kept for the returned teacher
    # queue, bf16 zero-padded copy streamed by the kernel.
    keys_f32 = jnp.concatenate([key, queue], axis=0)           # (N_KEYS, D_OUT)
    keys_bf16 = jnp.pad(keys_f32.astype(jnp.bfloat16),
                        ((0, N_PAD - N_KEYS), (0, 0)))         # (N_PAD, D_OUT)

    cost = pl.CostEstimate(
        flops=2 * B * N_PAD * D_OUT,
        transcendentals=2 * B * N_PAD,
        bytes_accessed=N_PAD * D_OUT * 2 + B * D_OUT * 2 + NCORES * B * 4)

    lse_part = pl.pallas_call(
        cskd_lse_kernel,
        grid=(NCORES, N_INNER),
        out_shape=jax.ShapeDtypeStruct((NCORES, B, 1), jnp.float32),
        in_specs=[
            pl.BlockSpec((B, D_OUT), lambda c, i: (0, 0)),                 # q_scaled
            pl.BlockSpec((TQ, D_OUT), lambda c, i: (c * N_INNER + i, 0)),  # key stream
        ],
        out_specs=pl.BlockSpec((1, B, 1), lambda c, i: (c, 0, 0)),
        scratch_shapes=[
            pltpu.VMEM((B, 1), jnp.float32),   # running max m
            pltpu.VMEM((B, 1), jnp.float32),   # running sum l
        ],
        compiler_params=pltpu.CompilerParams(
            dimension_semantics=("parallel", "arbitrary"),
            vmem_limit_bytes=32 * 1024 * 1024),
        cost_estimate=cost,
    )(q_scaled, keys_bf16)

    # combine per-core partial LSEs; finish cross-entropy (+ optional MSE)
    lse = jax.scipy.special.logsumexp(lse_part[:, :, 0], axis=0)  # (B,)
    loss = jnp.mean(lse - diag)
    if MSE == 1:
        loss = loss + jnp.mean((sf - tf) ** 2)

    # new teacher queue = cat([key, queue])[:min(B+Q, queue_len)] (plain XLA)
    new_queue = keys_f32[: min(N_KEYS, QUEUE_LEN)]
    return loss, new_queue, temp


def cskd_reference(logit_scale, student_feat, teacher_feat, queue, W, b):
    sf = student_feat @ W + b
    tf = teacher_feat
    key = tf / jnp.linalg.norm(tf, axis=-1, keepdims=True)
    query = sf / jnp.linalg.norm(sf, axis=-1, keepdims=True)
    temp = jnp.exp(logit_scale[0]) if TEMP_EXP == 1 else logit_scale[0]
    key_full = jnp.concatenate([key, queue], axis=0)
    scores = temp * (query @ key_full.T)
    lse = jax.scipy.special.logsumexp(scores, axis=-1)
    loss = jnp.mean(lse - scores[jnp.arange(B), jnp.arange(B)])
    if MSE == 1:
        loss = loss + jnp.mean((sf - tf) ** 2)
    new_queue = key_full[: min(B + Q, QUEUE_LEN)]
    return loss, new_queue, temp


if __name__ == "__main__":
    # TODO(synk): the student/teacher transformer encoders and dist.all_gather
    # have no in-kernel equivalent; their pooled outputs are synthesized inputs.
    root = jax.random.PRNGKey(0)
    k1, k2, k3, k4, k5 = jax.random.split(root, 5)

    student_feat = jax.random.normal(k1, (B, D_IN), jnp.float32)
    teacher_feat = jax.random.normal(k2, (B, D_OUT), jnp.float32)
    queue_raw = jax.random.normal(k3, (Q, D_OUT), jnp.float32)
    queue = queue_raw / jnp.linalg.norm(queue_raw, axis=-1, keepdims=True)

    # Deterministic "nn.Linear(D_IN, D_OUT)" parameters.
    W = jax.random.normal(k4, (D_IN, D_OUT), jnp.float32) / jnp.sqrt(D_IN)
    b = jax.random.normal(k5, (1, D_OUT), jnp.float32) * 0.01
    logit_scale = jnp.array([TEMP_INIT], jnp.float32)

    loss, teacher_queue, temp = cskd_forward(
        logit_scale, student_feat, teacher_feat, queue, W, b)
    jax.block_until_ready((loss, teacher_queue, temp))

    # Sanity check against a plain-JAX f32 reference (bf16 key stream in the
    # kernel -> slightly looser loss tolerance).
    ref_loss, ref_queue, ref_temp = cskd_reference(
        logit_scale, student_feat, teacher_feat, queue, W, b)
    assert jnp.allclose(loss, ref_loss, rtol=5e-3, atol=5e-3), (loss, ref_loss)
    assert jnp.allclose(temp, ref_temp, rtol=1e-5, atol=1e-6)
    assert jnp.allclose(teacher_queue, ref_queue, rtol=1e-4, atol=1e-5)

    print("KERNEL_OK")
</pallas_src>

<mosaic_0001>
module attributes {stable_mosaic.version = 11 : i64} {
  func.func @cskd_lse_kernel(%arg0: i32, %arg1: i32, %arg2: memref<8x128xbf16, #tpu.memory_space<vmem>>, %arg3: memref<128x128xbf16, #tpu.memory_space<vmem>>, %arg4: memref<1x8x1xf32, #tpu.memory_space<vmem>>, %arg5: memref<8x1xf32, #tpu.memory_space<vmem>>, %arg6: memref<8x1xf32, #tpu.memory_space<vmem>>) attributes {dimension_semantics = [#tpu.dimension_semantics<parallel>, #tpu.dimension_semantics<arbitrary>], iteration_bounds = array<i64: 2, 2>, scalar_prefetch = 0 : i64, scratch_operands = 2 : i64, tpu.core_type = #tpu.core_type<tc>, window_params = [{pipeline_mode = #tpu.pipeline_mode<synchronous>, transform_indices = @transform_0, window_bounds = array<i64: 8, 128>}, {transform_indices = @transform_1, window_bounds = array<i64: 128, 128>}, {transform_indices = @transform_2, window_bounds = array<i64: 1, 8, 1>}]} {
    %c0_i32 = arith.constant 0 : i32
    %0 = arith.cmpi eq, %arg1, %c0_i32 : i32
    %1 = arith.extui %0 : i1 to i32
    %c0_i32_0 = arith.constant 0 : i32
    %2 = arith.cmpi ne, %1, %c0_i32_0 : i32
    scf.if %2 {
      %cst_16 = arith.constant -1.000000e+30 : f32
      %35 = vector.broadcast %cst_16 : f32 to vector<8x1xf32>
      %c0_17 = arith.constant 0 : index
      %c0_18 = arith.constant 0 : index
      %36 = vector.load %arg5[%c0_17, %c0_18] : memref<8x1xf32, #tpu.memory_space<vmem>>, vector<8x1xf32>
      tpu.vector_store %arg5[%c0_17, %c0_18], %35 {strides = array<i32>} : memref<8x1xf32, #tpu.memory_space<vmem>>, vector<8x1xf32>,
      %cst_19 = arith.constant 0.000000e+00 : f32
      %37 = vector.broadcast %cst_19 : f32 to vector<8x1xf32>
      %c0_20 = arith.constant 0 : index
      %c0_21 = arith.constant 0 : index
      %38 = vector.load %arg6[%c0_20, %c0_21] : memref<8x1xf32, #tpu.memory_space<vmem>>, vector<8x1xf32>
      tpu.vector_store %arg6[%c0_20, %c0_21], %37 {strides = array<i32>} : memref<8x1xf32, #tpu.memory_space<vmem>>, vector<8x1xf32>,
    } else {
    }
    %c0 = arith.constant 0 : index
    %c0_1 = arith.constant 0 : index
    %3 = vector.load %arg2[%c0, %c0_1] : memref<8x128xbf16, #tpu.memory_space<vmem>>, vector<8x128xbf16>
    %c0_2 = arith.constant 0 : index
    %c0_3 = arith.constant 0 : index
    %4 = vector.load %arg3[%c0_2, %c0_3] : memref<128x128xbf16, #tpu.memory_space<vmem>>, vector<128x128xbf16>
    %cst = arith.constant dense<0.000000e+00> : vector<8x128xf32>
    %5 = tpu.matmul %3, %4, %cst {dimension_numbers = #tpu.dot_dimension_numbers<[1], [1], [0], [0], [0, 0, 1, 0], [], []>} : vector<8x128xbf16>, vector<128x128xbf16>, vector<8x128xf32> -> vector<8x128xf32>
    %c2_i32 = arith.constant 2 : i32
    %6 = arith.muli %arg0, %c2_i32 : i32
    %7 = arith.addi %6, %arg1 : i32
    %c128_i32 = arith.constant 128 : i32
    %8 = arith.muli %7, %c128_i32 : i32
    %9 = tpu.iota {dimensions = array<i32: 1>} : vector<8x128xi32>
    %10 = vector.broadcast %8 : i32 to vector<8x128xi32>
    %11 = arith.addi %10, %9 : vector<8x128xi32>
    %c258_i32 = arith.constant 258 : i32
    %12 = vector.broadcast %c258_i32 : i32 to vector<8x128xi32>
    %13 = arith.cmpi slt, %11, %12 : vector<8x128xi32>
    %cst_4 = arith.constant -1.000000e+30 : f32
    %14 = vector.broadcast %cst_4 : f32 to vector<8x128xf32>
    %15 = arith.select %13, %5, %14 : vector<8x128xi1>, vector<8x128xf32>
    %c0_5 = arith.constant 0 : index
    %c0_6 = arith.constant 0 : index
    %16 = vector.load %arg5[%c0_5, %c0_6] : memref<8x1xf32, #tpu.memory_space<vmem>>, vector<8x1xf32>
    %cst_7 = arith.constant dense<0xFF800000> : vector<8xf32>
    %17 = vector.multi_reduction <maximumf>, %15, %cst_7 [1] : vector<8x128xf32> to vector<8xf32>
    %18 = vector.shape_cast %17 : vector<8xf32> to vector<8x1xf32>
    %19 = arith.maximumf %16, %18 : vector<8x1xf32>
    %20 = arith.subf %16, %19 : vector<8x1xf32>
    %21 = math.exp %20 : vector<8x1xf32>
    %c0_8 = arith.constant 0 : index
    %c0_9 = arith.constant 0 : index
    %22 = vector.load %arg6[%c0_8, %c0_9] : memref<8x1xf32, #tpu.memory_space<vmem>>, vector<8x1xf32>
    %23 = arith.mulf %21, %22 : vector<8x1xf32>
    %24 = vector.broadcast %19 : vector<8x1xf32> to vector<8x128xf32>
    %25 = arith.subf %15, %24 : vector<8x128xf32>
    %26 = math.exp %25 : vector<8x128xf32>
    %cst_10 = arith.constant dense<0.000000e+00> : vector<8xf32>
    %27 = vector.multi_reduction <add>, %26, %cst_10 [1] : vector<8x128xf32> to vector<8xf32>
    %28 = vector.shape_cast %27 : vector<8xf32> to vector<8x1xf32>
    %29 = arith.addf %23, %28 : vector<8x1xf32>
    %c0_11 = arith.constant 0 : index
    %c0_12 = arith.constant 0 : index
    %30 = vector.load %arg6[%c0_11, %c0_12] : memref<8x1xf32, #tpu.memory_space<vmem>>, vector<8x1xf32>
    tpu.vector_store %arg6[%c0_11, %c0_12], %29 {strides = array<i32>} : memref<8x1xf32, #tpu.memory_space<vmem>>, vector<8x1xf32>,
    %c0_13 = arith.constant 0 : index
    %c0_14 = arith.constant 0 : index
    %31 = vector.load %arg5[%c0_13, %c0_14] : memref<8x1xf32, #tpu.memory_space<vmem>>, vector<8x1xf32>
    tpu.vector_store %arg5[%c0_13, %c0_14], %19 {strides = array<i32>} : memref<8x1xf32, #tpu.memory_space<vmem>>, vector<8x1xf32>,
    %c1_i32 = arith.constant 1 : i32
    %32 = arith.cmpi eq, %arg1, %c1_i32 : i32
    %33 = arith.extui %32 : i1 to i32
    %c0_i32_15 = arith.constant 0 : i32
    %34 = arith.cmpi ne, %33, %c0_i32_15 : i32
    scf.if %34 {
      %c0_16 = arith.constant 0 : index
      %c0_17 = arith.constant 0 : index
      %35 = vector.load %arg5[%c0_16, %c0_17] : memref<8x1xf32, #tpu.memory_space<vmem>>, vector<8x1xf32>
      %c0_18 = arith.constant 0 : index
      %c0_19 = arith.constant 0 : index
      %36 = vector.load %arg6[%c0_18, %c0_19] : memref<8x1xf32, #tpu.memory_space<vmem>>, vector<8x1xf32>
      %37 = math.log %36 : vector<8x1xf32>
      %38 = arith.addf %35, %37 : vector<8x1xf32>
      %c0_20 = arith.constant 0 : index
      %c0_21 = arith.constant 0 : index
      %c0_22 = arith.constant 0 : index
      %39 = vector.load %arg4[%c0_20, %c0_21, %c0_22] : memref<1x8x1xf32, #tpu.memory_space<vmem>>, vector<1x8x1xf32>
      %40 = vector.shape_cast %39 : vector<1x8x1xf32> to vector<8x1xf32>
      %41 = vector.shape_cast %38 : vector<8x1xf32> to vector<1x8x1xf32>
      tpu.vector_store %arg4[%c0_20, %c0_21, %c0_22], %41 {strides = array<i32>} : memref<1x8x1xf32, #tpu.memory_space<vmem>>, vector<1x8x1xf32>,
    } else {
    }
    return
  }
  func.func @transform_0(%arg0: i32, %arg1: i32) -> (i32, i32) {
    %c0_i32 = arith.constant 0 : i32
    %c0_i32_0 = arith.constant 0 : i32
    %c0_i32_1 = arith.constant 0 : i32
    return %c0_i32, %c0_i32_0 : i32, i32
  }
  func.func @transform_1(%arg0: i32, %arg1: i32) -> (i32, i32) {
    %c2_i32 = arith.constant 2 : i32
    %0 = arith.muli %arg0, %c2_i32 : i32
    %1 = arith.addi %0, %arg1 : i32
    %c0_i32 = arith.constant 0 : i32
    %c0_i32_0 = arith.constant 0 : i32
    return %1, %c0_i32 : i32, i32
  }
  func.func @transform_2(%arg0: i32, %arg1: i32) -> (i32, i32, i32) {
    %c0_i32 = arith.constant 0 : i32
    %c0_i32_0 = arith.constant 0 : i32
    %c0_i32_1 = arith.constant 0 : i32
    return %arg0, %c0_i32, %c0_i32_0 : i32, i32, i32
  }
}

</mosaic_0001>

<llo_original>
// kernel: cskd_forward.1
$region0: #{cskd_forward.1}
  #allocation0 [shape = 'u32[]', space=smem, size = 0x4, offset = 0x4, fixed_abs, tag = 'smem constant byte address 0x4 - core index']
  #allocation1 [shape = 'u32[144,128]{1,0:T(1,128)}', space=vmem, size = 0x12000, scoped, tag = 'internal scratch']
  #allocation2 [shape = 'f32[8,1]{1,0:T(8,128)}', space=vmem, size = 0x1000, scoped, tag = 'scratch operand']
  #allocation3 [shape = 'f32[8,1]{1,0:T(8,128)}', space=vmem, size = 0x1000, scoped, tag = 'scratch operand']
  %s0 = inlined_call_operand.vmem [shape: bf16[8,128], index: 0, kind: input, shape index: {}]
  %s1 = inlined_call_operand.vmem [shape: bf16[512,128], index: 1, kind: input, shape index: {}]
  %s2 = inlined_call_operand.vmem [shape: f32[2,8,1], index: 2, kind: output, shape index: {}]
  %s3 = sld [smem:[#allocation0]]
  $region49: #{cskd_forward.1} parent=0
    _
  %s5 = ssub.s32 1, %s3
  %s6 = scalar_select 0, %s5, %s3
  loop: start=0, step=1, limit=6
  $region2: #{cskd_forward.1} parent=0 // loop_pre_header
    _
  $region3: #{cskd_forward.1} parent=0 // loop_header
    %s8 = sphi 0, %s12
    %p9 = scmp.ge.s32.totalorder %s8, 6
    %s15 = sphi 0, %s27
    %s16 = sphi 0, %s23
    %s17 = sphi 0, %s15
    %s18 = sphi 0, %s16
    %s19 = sphi 0, %s17
    %s20 = sphi 0, %s18
    %s28 = sphi 0, %s28
    %s30 = sphi 0, %s28
    %s31 = sphi 0, %s30
    %s45 = sphi 0, %s31
    %s55 = sphi 0, %s57
    %s58 = sphi 0, %s55
    %s59 = sphi 0, %s58
    %s75 = sphi 0, %s59
    %s81 = sphi 0, %s83
    %s84 = sphi 0, %s81
    %s85 = sphi 0, %s84
    %s101 = sphi 0, %s85
  $region4: #{cskd_forward.1} parent=0 // loop_header_branch
    %11 = sbr.rel (%p9) target = $region8
  $region5: #{cskd_forward.1} parent=0 // loop_body
    %s13 = ssub.s32 %s8, 1
    %s14 = ssub.s32 %s8, 2
    %s21 = sadd.s32 1, %s16
    %p22 = scmp.ge.s32.totalorder %s21, 2
    %s23 = scalar_select %p22, 0, %s21
    %s24 = sadd.s32 1, %s15
    %s25 = scalar_select %p22, %s24, %s15
    %p26 = scmp.ge.s32.totalorder %s25, 2
    %s27 = scalar_select %p26, 0, %s25
    %s29 = sadd.s32 %s28, 1
    %p32 = scmp.eq.s32.totalorder %s8, 3
    %p33 = scmp.ne.s32.totalorder %s28, %s30
    %p34 = scmp.eq.s32.totalorder %s8, 0
    %p35 = por %p33, %p34
    %p36 = scmp.ne.s32.totalorder %s28, %s30
    %p37 = scmp.eq.s32.totalorder %s13, 3
    %p38 = por %p36, %p37
    %p39 = scmp.ne.s32.totalorder %s30, %s31
    %p40 = scmp.eq.s32.totalorder %s13, 0
    %p41 = por %p39, %p40
    %p42 = scmp.ne.s32.totalorder %s30, %s31
    %p43 = scmp.eq.s32.totalorder %s14, 3
    %p44 = por %p42, %p43
    %p46 = scmp.ne.s32.totalorder %s31, %s45
    %p47 = scmp.eq.s32.totalorder %s14, 0
    %p48 = por %p46, %p47
    %s49 = smul.u32 %s15, 2
    %s50 = sadd.s32 %s49, %s16
    %s51 = smul.u32 %s27, 2
    %s52 = sadd.s32 %s51, %s23
    %s53 = ssub.s32 %s50, %s52
    %p54 = scmp.eq.s32.totalorder %s53, 0
    %s56 = sadd.s32 %s55, 1
    %s57 = scalar_select %p54, %s55, %s56
    %p60 = pneg %p54
    %p61 = scmp.eq.s32.totalorder %s8, 3
    %p62 = por %p60, %p61
    %p63 = scmp.ne.s32.totalorder %s55, %s58
    %p64 = scmp.eq.s32.totalorder %s8, 0
    %p65 = por %p63, %p64
    %p66 = scmp.ne.s32.totalorder %s55, %s58
    %p67 = scmp.eq.s32.totalorder %s13, 3
    %p68 = por %p66, %p67
    %p69 = scmp.ne.s32.totalorder %s58, %s59
    %p70 = scmp.eq.s32.totalorder %s13, 0
    %p71 = por %p69, %p70
    %p72 = scmp.ne.s32.totalorder %s58, %s59
    %p73 = scmp.eq.s32.totalorder %s14, 3
    %p74 = por %p72, %p73
    %p76 = scmp.ne.s32.totalorder %s59, %s75
    %p77 = scmp.eq.s32.totalorder %s14, 0
    %p78 = por %p76, %p77
    %s79 = ssub.s32 %s15, %s27
    %p80 = scmp.eq.s32.totalorder %s79, 0
    %s82 = sadd.s32 %s81, 1
    %s83 = scalar_select %p80, %s81, %s82
    %p86 = pneg %p80
    %p87 = scmp.eq.s32.totalorder %s8, 3
    %p88 = por %p86, %p87
    %p89 = scmp.ne.s32.totalorder %s81, %s84
    %p90 = scmp.eq.s32.totalorder %s8, 0
    %p91 = por %p89, %p90
    %p92 = scmp.ne.s32.totalorder %s81, %s84
    %p93 = scmp.eq.s32.totalorder %s13, 3
    %p94 = por %p92, %p93
    %p95 = scmp.ne.s32.totalorder %s84, %s85
    %p96 = scmp.eq.s32.totalorder %s13, 0
    %p97 = por %p95, %p96
    %p98 = scmp.ne.s32.totalorder %s84, %s85
    %p99 = scmp.eq.s32.totalorder %s14, 3
    %p100 = por %p98, %p99
    %p102 = scmp.ne.s32.totalorder %s85, %s101
    %p103 = scmp.eq.s32.totalorder %s14, 0
    %p104 = por %p102, %p103
    %p105 = scmp.le.s32.totalorder 1, %s8
    %p106 = scmp.lt.s32.totalorder %s8, 5
    %p107 = pnand %p105, %p106
    %p108 = pneg %p107
    // Predicated region
    $region9: #{cskd_forward.1} parent=5 // pred_check
      _
    $region10: #{cskd_forward.1} parent=5 // pred_check_branch
      %110 = sbr.rel (%p107) target = $region12
    $region11: #{cskd_forward.1} parent=5 // pred_region
      %s111 = ssub.s32 %s8, 1
      // Predicated region
      $region13: #{cskd_forward.1} parent=11 // pred_check
        %p112 = pneg %p41
      $region14: #{cskd_forward.1} parent=11 // pred_check_branch
        %114 = sbr.rel (%p112) target = $region16
      $region15: #{cskd_forward.1} parent=11 // pred_region
        _
      $region16: #{cskd_forward.1} parent=11 // pred_fallthru
        _
    $region12: #{cskd_forward.1} parent=5 // pred_fallthru
      _
    %p115 = scmp.lt.s32.totalorder %s8, 4
    // Predicated region
    $region17: #{cskd_forward.1} parent=5 // pred_check
      %p116 = pneg %p115
    $region18: #{cskd_forward.1} parent=5 // pred_check_branch
      %118 = sbr.rel (%p116) target = $region20
    $region19: #{cskd_forward.1} parent=5 // pred_region
      // Predicated region
      $region21: #{cskd_forward.1} parent=19 // pred_check
        %p119 = pneg %p65
      $region22: #{cskd_forward.1} parent=19 // pred_check_branch
        %121 = sbr.rel (%p119) target = $region24
      $region23: #{cskd_forward.1} parent=19 // pred_region
        %s122 = smul.u32 %s15, 2
        %s123 = sadd.s32 %s122, %s16
        %s124 = smul.u32 16, %s123
        %p125 = scmp.lt.s32.totalorder %s124, 63
        %s126 = scalar_select %p125, %s124, 63
        %s127 = smul.addr %s126, 4
        %s128 = scalar_lea.vmem %s1, %s127
        %s129 = smul.u32 %s15, 2
        %s130 = sadd.s32 %s129, %s16
        %s131 = smul.u32 16, %s130
      $region24: #{cskd_forward.1} parent=19 // pred_fallthru
        _
    $region20: #{cskd_forward.1} parent=5 // pred_fallthru
      _
    %p132 = scmp.le.s32.totalorder 1, %s8
    %p133 = scmp.lt.s32.totalorder %s8, 5
    %p134 = pnand %p132, %p133
    %p135 = pneg %p134
    // Predicated region
    $region25: #{cskd_forward.1} parent=5 // pred_check
      _
    $region26: #{cskd_forward.1} parent=5 // pred_check_branch
      %137 = sbr.rel (%p134) target = $region28
    $region27: #{cskd_forward.1} parent=5 // pred_region
      %s138 = ssub.s32 %s8, 1
      %p139 = pneg %p41
      %p140 = pneg %p38
      %s141 = smul.u32 %s17, 2
      %s142 = sadd.s32 %s141, %s18
      %s143 = smul.u32 16, %s142
      %p144 = scmp.lt.s32.totalorder %s143, 63
      %s145 = scalar_select %p144, %s143, 63
      %s146 = smul.addr %s145, 4
      %s147 = scalar_lea.vmem %s1, %s146
      %p148 = pneg %p71
      %p149 = pneg %p68
      %p150 = pneg %p97
      %p151 = pneg %p94
      %p152 = scmp.lt.s32.totalorder %s17, 1
      %s153 = scalar_select %p152, %s17, 1
      %s154 = smul.addr %s153, 8
      %s155 = scalar_lea.vmem %s2, %s154
      %s156 = smul.u32 %s17, 2
      %s157 = sadd.s32 %s156, %s18
      %s158 = smul.u32 16, %s157
      %p159 = scmp.lt.s32.totalorder %s158, 63
      %s160 = scalar_select %p159, %s158, 63
      %s161 = smul.addr %s160, 4
      %s162 = scalar_lea.vmem %s1, %s161
      %s163 = smul.u32 %s17, 2
      %s164 = sadd.s32 %s163, %s18
      %s165 = smul.u32 16, %s164
      %p166 = scmp.lt.s32.totalorder %s17, 1
      %s167 = scalar_select %p166, %s17, 1
      %s168 = smul.addr %s167, 8
      %s169 = scalar_lea.vmem %s2, %s168
      %p171 = scmp.eq.s32.totalorder %s18, 0
      // Predicated region
      $region29: #{cskd_forward.1} parent=27 // pred_check
        %p172 = pneg %p171
      $region30: #{cskd_forward.1} parent=27 // pred_check_branch
        %174 = sbr.rel (%p172) target = $region32
      $region31: #{cskd_forward.1} parent=27 // pred_region
        %vm175 = vcmask 7168
        %176 = vst.msk [vmem:[#allocation2] sm:$0xff] %vm175, -1e+30
        %177 = vst.msk [vmem:[#allocation3] sm:$0xff] %vm175, 0.0
      $region32: #{cskd_forward.1} parent=27 // pred_fallthru
        _
      %v178 = vld [vmem:[%s0] sm:$0xf]
      %v179 = vld [vmem:[%s162] sm:$0xf]
      %v180 = vld [vmem:[%s162 + $0x4] sm:$0xf]
      %v181 = vld [vmem:[%s162 + $0x8] sm:$0xf]
      %v182 = vld [vmem:[%s162 + $0xc] sm:$0xf]
      %v183 = vld [vmem:[%s162 + $0x10] sm:$0xf]
      %v184 = vld [vmem:[%s162 + $0x14] sm:$0xf]
      %v185 = vld [vmem:[%s162 + $0x18] sm:$0xf]
      %v186 = vld [vmem:[%s162 + $0x1c] sm:$0xf]
      %v187 = vld [vmem:[%s162 + $0x20] sm:$0xf]
      %v188 = vld [vmem:[%s162 + $0x24] sm:$0xf]
      %v189 = vld [vmem:[%s162 + $0x28] sm:$0xf]
      %v190 = vld [vmem:[%s162 + $0x2c] sm:$0xf]
      %v191 = vld [vmem:[%s162 + $0x30] sm:$0xf]
      %v192 = vld [vmem:[%s162 + $0x34] sm:$0xf]
      %v193 = vld [vmem:[%s162 + $0x38] sm:$0xf]
      %v194 = vld [vmem:[%s162 + $0x3c] sm:$0xf]
      %v211 = vunpack.c.l.b16 %v179
      %v212 = vunpack.c.l.b16 %v180
      %v213 = vunpack.c.l.b16 %v181
      %v214 = vunpack.c.l.b16 %v182
      %v215 = vunpack.c.l.b16 %v183
      %v216 = vunpack.c.l.b16 %v184
      %v217 = vunpack.c.l.b16 %v185
      %v218 = vunpack.c.l.b16 %v186
      %v219 = vunpack.c.l.b16 %v187
      %v220 = vunpack.c.l.b16 %v188
      %v221 = vunpack.c.l.b16 %v189
      %v222 = vunpack.c.l.b16 %v190
      %v223 = vunpack.c.l.b16 %v191
      %v224 = vunpack.c.l.b16 %v192
      %v225 = vunpack.c.l.b16 %v193
      %v226 = vunpack.c.l.b16 %v194
      %v227 = vpack.c.b16 %v212, %v211
      %v228 = vpack.c.b16 %v214, %v213
      %v229 = vpack.c.b16 %v216, %v215
      %v230 = vpack.c.b16 %v218, %v217
      %v231 = vpack.c.b16 %v220, %v219
      %v232 = vpack.c.b16 %v222, %v221
      %v233 = vpack.c.b16 %v224, %v223
      %v234 = vpack.c.b16 %v226, %v225
      %243 = vmatprep.subr.bf16.mxu0 0
      %244 = vmatpush1.bf16.xpose.msra.mxu0 %v234
      %245 = vmatprep.subr.bf16.mxu0 0
      %246 = vmatpush1.bf16.xpose.msra.mxu0 %v233
      %247 = vmatprep.subr.bf16.mxu0 0
      %248 = vmatpush1.bf16.xpose.msra.mxu0 %v232
      %249 = vmatprep.subr.bf16.mxu0 0
      %250 = vmatpush1.bf16.xpose.msra.mxu0 %v231
      %251 = vmatprep.subr.bf16.mxu0 0
      %252 = vmatpush1.bf16.xpose.msra.mxu0 %v230
      %253 = vmatprep.subr.bf16.mxu0 0
      %254 = vmatpush1.bf16.xpose.msra.mxu0 %v229
      %255 = vmatprep.subr.bf16.mxu0 0
      %256 = vmatpush1.bf16.xpose.msra.mxu0 %v228
      %257 = vmatprep.subr.bf16.mxu0 0
      %258 = vmatpush1.bf16.xpose.msra.mxu0 %v227
      %259 = vmatprep.subr.bf16.mxu0 0
      %260 = vmatpush2.bf16.xpose.msra.mxu0 0
      %261 = vmatprep.subr.bf16.mxu0 0
      %262 = vmatpush2.bf16.xpose.msra.mxu0 0
      %263 = vmatprep.subr.bf16.mxu0 0
      %264 = vmatpush2.bf16.xpose.msra.mxu0 0
      %265 = vmatprep.subr.bf16.mxu0 0
      %266 = vmatpush2.bf16.xpose.msra.mxu0 0
      %267 = vmatprep.subr.bf16.mxu0 0
      %268 = vmatpush2.bf16.xpose.msra.mxu0 0
      %269 = vmatprep.subr.bf16.mxu0 0
      %270 = vmatpush2.bf16.xpose.msra.mxu0 0
      %271 = vmatprep.subr.bf16.mxu0 0
      %272 = vmatpush2.bf16.xpose.msra.mxu0 0
      %273 = vmatprep.subr.bf16.mxu0 0
      %274 = vmatpush2.bf16.xpose.msra.mxu0 0
      %275 = vmatprep.mubr.bf16.mxu0 0
      %276 = vmatmul.mubr.bf16.gmra.mxu0 %v178
      %v277 = vpop.f32.mrf.mxu0
      %v278 = vadd.f32 0.0, %v277
      %v279 = vpop.f32.mrf.mxu0
      %v280 = vpop.f32.mrf.mxu0
      %v281 = vpop.f32.mrf.mxu0
      %282 = vdwg.mxu0
      %s283 = smul.u32 %s17, 2
      %s284 = sadd.s32 %s283, %s18
      %s285 = smul.u32 %s284, 128
      %v286 = vlaneseq
      %v287 = vand.u32 %v286, 127
      %v288 = vstv %s285
      %v289 = vadd.s32 %v288, %v287
      %vm290 = vcmp.lt.s32.totalorder %v289, 258
      %v291 = vsel %vm290, %v278, -1e+30
      %v292 = vld [vmem:[#allocation2] sm:$0xff]
      %293 = vmax.xlane.f32.xlu0 %v291
      %v294 = vpop.xlane.xlu0 %293
      %v295 = vmax.f32 %v292, %v294
      %v296 = vsub.f32 %v292, %v295
      %v297 = vmul.f32 %v296, 1.442695
      %v298 = vpow.pop %v297
      %v299 = vld [vmem:[#allocation3] sm:$0xff]
      %v300 = vmul.f32 %v298, %v299
      %302 = vset.pattern.permute.xlu0 0
      %303 = vperm.xlu0 %302, %v295
      %v304 = vpop.permute.xlu0 %303
      %v306 = vsub.f32 %v291, %v304
      %v307 = vmul.f32 %v306, 1.442695
      %v308 = vpow.pop %v307
      %309 = vadd.xlane.f32.xlu0 %v308
      %v310 = vpop.xlane.xlu0 %309
      %v311 = vadd.f32 %v300, %v310
      %vm312 = vcmask 7168
      %313 = vst.msk [vmem:[#allocation3] sm:$0xff] %vm312, %v311
      %314 = vst.msk [vmem:[#allocation2] sm:$0xff] %vm312, %v295
      %p315 = scmp.eq.s32.totalorder %s18, 1
      // Predicated region
      $region33: #{cskd_forward.1} parent=27 // pred_check
        %p316 = pneg %p315
      $region34: #{cskd_forward.1} parent=27 // pred_check_branch
        %318 = sbr.rel (%p316) target = $region36
      $region35: #{cskd_forward.1} parent=27 // pred_region
        %v319 = vld [vmem:[#allocation2] sm:$0xff]
        %v320 = vld [vmem:[#allocation3] sm:$0xff]
        %v321 = vlog2.pop %v320
        %v322 = vmul.f32 %v321, 0.6931472
        %v323 = vadd.f32 %v319, %v322
        %324 = vst.msk [vmem:[%s169] sm:$0xff] %vm312, %v323
      $region36: #{cskd_forward.1} parent=27 // pred_fallthru
        _
      %p325 = scmp.lt.s32.totalorder %s17, 1
      %s326 = scalar_select %p325, %s17, 1
      %s327 = smul.addr %s326, 8
      %s328 = scalar_lea.vmem %s2, %s327
      // Predicated region
      $region37: #{cskd_forward.1} parent=27 // pred_check
        %p329 = pneg %p94
      $region38: #{cskd_forward.1} parent=27 // pred_check_branch
        %331 = sbr.rel (%p329) target = $region40
      $region39: #{cskd_forward.1} parent=27 // pred_region
        _
      $region40: #{cskd_forward.1} parent=27 // pred_fallthru
        _
    $region28: #{cskd_forward.1} parent=5 // pred_fallthru
      _
    %p332 = scmp.le.s32.totalorder 2, %s8
    // Predicated region
    $region41: #{cskd_forward.1} parent=5 // pred_check
      %p333 = pneg %p332
    $region42: #{cskd_forward.1} parent=5 // pred_check_branch
      %335 = sbr.rel (%p333) target = $region44
    $region43: #{cskd_forward.1} parent=5 // pred_region
      %s336 = ssub.s32 %s8, 2
      // Predicated region
      $region45: #{cskd_forward.1} parent=43 // pred_check
        %p337 = pneg %p100
      $region46: #{cskd_forward.1} parent=43 // pred_check_branch
        %339 = sbr.rel (%p337) target = $region48
      $region47: #{cskd_forward.1} parent=43 // pred_region
        %p340 = scmp.lt.s32.totalorder %s19, 1
        %s341 = scalar_select %p340, %s19, 1
        %s342 = smul.addr %s341, 8
        %s343 = scalar_lea.vmem %s2, %s342
      $region48: #{cskd_forward.1} parent=43 // pred_fallthru
        _
    $region44: #{cskd_forward.1} parent=5 // pred_fallthru
      _
  $region6: #{cskd_forward.1} parent=0 // loop_footer
    %s12 = sadd.s32 1, %s8
  $region7: #{cskd_forward.1} parent=0 // loop_footer_branch
    %7 = sbr.rel target = $region3
  $region8: #{cskd_forward.1} parent=0 // loop_exit
    _

</llo_original>
